<compile_context>
chip_gen: v5e
topology: v5e:2x2
jax: 0.10.0
libtpu: 0.0.40
codegen_flags: <defaults>
</compile_context>

<pallas_src>
import functools

import jax
import jax.numpy as jnp
from jax.experimental import pallas as pl
from jax.experimental.pallas import tpu as pltpu


def classifier_kernel(x_ref, w1_ref, b1_ref, w2_ref, b2_ref, w3_ref, b3_ref,
                      o_ref, *, inv_hw):
    # x_ref: (TB, HW, 512) f32, channels on lanes.
    # Global average pool: sum over spatial axis, scale once by 1/(H*W).
    pooled = jnp.sum(x_ref[...], axis=1) * inv_hw                      # (TB, 512)

    # Linear(512, 256) + ReLU   (Dropout -> identity in eval mode)
    h1 = jnp.dot(pooled, w1_ref[...], preferred_element_type=jnp.float32) + b1_ref[...]
    h1 = jnp.maximum(h1, 0.0)

    # Linear(256, 256) + ReLU   (Dropout -> identity in eval mode)
    h2 = jnp.dot(h1, w2_ref[...], preferred_element_type=jnp.float32) + b2_ref[...]
    h2 = jnp.maximum(h2, 0.0)

    # Linear(256, NC_PAD) -- output padded to a lane-dense 128-wide slab.
    out = jnp.dot(h2, w3_ref[...], preferred_element_type=jnp.float32) + b3_ref[...]
    o_ref[...] = out.astype(o_ref.dtype)


def classifier_forward(x_nchw, params, *, tb=8):
    """x_nchw: (B, 512, H, W) float32. Returns (B, num_classes) float32.

    tb: batch tile size.  Re-derive for v7x (64 MiB VMEM) vs v6e/v5e when
    scaling up; per-step x footprint is tb * H*W * 512 * 4B * 2 (double-buffer).
    """
    w1, b1, w2, b2, w3, b3 = params
    B, C, H, W = x_nchw.shape
    assert C == 512, "Classifier expects 512 input channels"
    HW = H * W
    num_classes = w3.shape[1]

    # --- layout: channels last (lane-dense), spatial collapsed ---------------
    x3 = jnp.transpose(x_nchw, (0, 2, 3, 1)).reshape(B, HW, C)         # (B, HW, 512)

    # --- pad batch to a multiple of the batch tile ---------------------------
    b_pad = pl.cdiv(B, tb) * tb
    if b_pad != B:
        x3 = jnp.pad(x3, ((0, b_pad - B), (0, 0), (0, 0)))

    # --- pad the final linear to a lane-dense width (multiple of 128) --------
    nc_pad = max(128, pl.cdiv(num_classes, 128) * 128)
    w3p = jnp.pad(w3, ((0, 0), (0, nc_pad - num_classes)))
    b3p = jnp.pad(b3, ((0, 0), (0, nc_pad - num_classes)))

    kernel = functools.partial(classifier_kernel, inv_hw=1.0 / float(HW))

    grid = (b_pad // tb,)
    out_padded = pl.pallas_call(
        kernel,
        out_shape=jax.ShapeDtypeStruct((b_pad, nc_pad), jnp.float32),
        grid_spec=pltpu.PrefetchScalarGridSpec(
            num_scalar_prefetch=0,
            grid=grid,
            in_specs=[
                # streamed input: one batch tile per grid step (double-buffered)
                pl.BlockSpec((tb, HW, C), lambda i: (i, 0, 0)),
                # weights / biases: constant block index -> stay resident in VMEM
                pl.BlockSpec(w1.shape, lambda i: (0, 0)),
                pl.BlockSpec(b1.shape, lambda i: (0, 0)),
                pl.BlockSpec(w2.shape, lambda i: (0, 0)),
                pl.BlockSpec(b2.shape, lambda i: (0, 0)),
                pl.BlockSpec(w3p.shape, lambda i: (0, 0)),
                pl.BlockSpec(b3p.shape, lambda i: (0, 0)),
            ],
            out_specs=pl.BlockSpec((tb, nc_pad), lambda i: (i, 0)),
        ),
        compiler_params=pltpu.CompilerParams(
            dimension_semantics=("parallel",),   # megacore sharding on v7x
            vmem_limit_bytes=64 * 1024 * 1024,
        ),
    )(x3, w1, b1, w2, b2, w3p, b3p)

    return out_padded[:B, :num_classes]


def init_params(key, num_classes):
    """Deterministic parameter init (same shapes as the PyTorch module)."""
    k1, k2, k3, k4, k5, k6 = jax.random.split(key, 6)
    # PyTorch Linear stores weight as (out, in); we keep (in, out) for x @ W.
    w1 = jax.random.normal(k1, (512, 256), jnp.float32) * 0.02
    b1 = jax.random.normal(k2, (1, 256), jnp.float32) * 0.01
    w2 = jax.random.normal(k3, (256, 256), jnp.float32) * 0.02
    b2 = jax.random.normal(k4, (1, 256), jnp.float32) * 0.01
    w3 = jax.random.normal(k5, (256, num_classes), jnp.float32) * 0.02
    b3 = jax.random.normal(k6, (1, num_classes), jnp.float32) * 0.01
    return (w1, b1, w2, b2, w3, b3)


def reference_forward(x_nchw, params):
    """Pure-JAX reference for correctness check."""
    w1, b1, w2, b2, w3, b3 = params
    pooled = jnp.mean(x_nchw, axis=(2, 3))                # AdaptiveAvgPool2d((1,1)) + Flatten
    h1 = jnp.maximum(pooled @ w1 + b1, 0.0)               # Linear + ReLU (Dropout = id)
    h2 = jnp.maximum(h1 @ w2 + b2, 0.0)                   # Linear + ReLU (Dropout = id)
    return h2 @ w3 + b3                                    # Linear(256, num_classes)


if __name__ == "__main__":
    num_classes = 10
    B, C, H, W = 2, 512, 4, 4   # channels fixed at 512 by Linear(512, 256)

    key = jax.random.PRNGKey(0)
    kx, kp = jax.random.split(key)
    x = jax.random.normal(kx, (B, C, H, W), jnp.float32)
    params = init_params(kp, num_classes)

    out = classifier_forward(x, params)
    out = jax.block_until_ready(out)

    ref = reference_forward(x, params)
    assert out.shape == (B, num_classes)
    assert jnp.allclose(out, ref, atol=1e-4, rtol=1e-4), "mismatch vs reference"

    print("KERNEL_OK")
</pallas_src>

<mosaic_0001>
module attributes {stable_mosaic.version = 11 : i64} {
  func.func @classifier_kernel(%arg0: i32, %arg1: memref<8x16x512xf32, #tpu.memory_space<vmem>>, %arg2: memref<512x256xf32, #tpu.memory_space<vmem>>, %arg3: memref<1x256xf32, #tpu.memory_space<vmem>>, %arg4: memref<256x256xf32, #tpu.memory_space<vmem>>, %arg5: memref<1x256xf32, #tpu.memory_space<vmem>>, %arg6: memref<256x128xf32, #tpu.memory_space<vmem>>, %arg7: memref<1x128xf32, #tpu.memory_space<vmem>>, %arg8: memref<8x128xf32, #tpu.memory_space<vmem>>) attributes {dimension_semantics = [#tpu.dimension_semantics<parallel>], iteration_bounds = array<i64: 1>, scalar_prefetch = 0 : i64, scratch_operands = 0 : i64, tpu.core_type = #tpu.core_type<tc>, window_params = [{transform_indices = @transform_0, window_bounds = array<i64: 8, 16, 512>}, {pipeline_mode = #tpu.pipeline_mode<synchronous>, transform_indices = @transform_1, window_bounds = array<i64: 512, 256>}, {pipeline_mode = #tpu.pipeline_mode<synchronous>, transform_indices = @transform_2, window_bounds = array<i64: 1, 256>}, {pipeline_mode = #tpu.pipeline_mode<synchronous>, transform_indices = @transform_3, window_bounds = array<i64: 256, 256>}, {pipeline_mode = #tpu.pipeline_mode<synchronous>, transform_indices = @transform_4, window_bounds = array<i64: 1, 256>}, {pipeline_mode = #tpu.pipeline_mode<synchronous>, transform_indices = @transform_5, window_bounds = array<i64: 256, 128>}, {pipeline_mode = #tpu.pipeline_mode<synchronous>, transform_indices = @transform_6, window_bounds = array<i64: 1, 128>}, {transform_indices = @transform_7, window_bounds = array<i64: 8, 128>}]} {
    %c0 = arith.constant 0 : index
    %c0_0 = arith.constant 0 : index
    %c0_1 = arith.constant 0 : index
    %0 = vector.load %arg1[%c0, %c0_0, %c0_1] : memref<8x16x512xf32, #tpu.memory_space<vmem>>, vector<8x16x512xf32>
    %cst = arith.constant dense<0.000000e+00> : vector<8x512xf32>
    %1 = vector.multi_reduction <add>, %0, %cst [1] : vector<8x16x512xf32> to vector<8x512xf32>
    %cst_2 = arith.constant 6.250000e-02 : f32
    %2 = vector.broadcast %cst_2 : f32 to vector<8x512xf32>
    %3 = arith.mulf %1, %2 : vector<8x512xf32>
    %c0_3 = arith.constant 0 : index
    %c0_4 = arith.constant 0 : index
    %4 = vector.load %arg2[%c0_3, %c0_4] : memref<512x256xf32, #tpu.memory_space<vmem>>, vector<512x256xf32>
    %cst_5 = arith.constant dense<0.000000e+00> : vector<8x256xf32>
    %5 = tpu.matmul %3, %4, %cst_5 {dimension_numbers = #tpu.dot_dimension_numbers<[1], [0], [0], [1], [0, 0, 1, 1], [], []>} : vector<8x512xf32>, vector<512x256xf32>, vector<8x256xf32> -> vector<8x256xf32>
    %c0_6 = arith.constant 0 : index
    %c0_7 = arith.constant 0 : index
    %6 = vector.load %arg3[%c0_6, %c0_7] : memref<1x256xf32, #tpu.memory_space<vmem>>, vector<1x256xf32>
    %7 = vector.broadcast %6 : vector<1x256xf32> to vector<8x256xf32>
    %8 = arith.addf %5, %7 : vector<8x256xf32>
    %cst_8 = arith.constant 0.000000e+00 : f32
    %9 = vector.broadcast %cst_8 : f32 to vector<8x256xf32>
    %10 = arith.maximumf %8, %9 : vector<8x256xf32>
    %c0_9 = arith.constant 0 : index
    %c0_10 = arith.constant 0 : index
    %11 = vector.load %arg4[%c0_9, %c0_10] : memref<256x256xf32, #tpu.memory_space<vmem>>, vector<256x256xf32>
    %cst_11 = arith.constant dense<0.000000e+00> : vector<8x256xf32>
    %12 = tpu.matmul %10, %11, %cst_11 {dimension_numbers = #tpu.dot_dimension_numbers<[1], [0], [0], [1], [0, 0, 1, 1], [], []>} : vector<8x256xf32>, vector<256x256xf32>, vector<8x256xf32> -> vector<8x256xf32>
    %c0_12 = arith.constant 0 : index
    %c0_13 = arith.constant 0 : index
    %13 = vector.load %arg5[%c0_12, %c0_13] : memref<1x256xf32, #tpu.memory_space<vmem>>, vector<1x256xf32>
    %14 = vector.broadcast %13 : vector<1x256xf32> to vector<8x256xf32>
    %15 = arith.addf %12, %14 : vector<8x256xf32>
    %cst_14 = arith.constant 0.000000e+00 : f32
    %16 = vector.broadcast %cst_14 : f32 to vector<8x256xf32>
    %17 = arith.maximumf %15, %16 : vector<8x256xf32>
    %c0_15 = arith.constant 0 : index
    %c0_16 = arith.constant 0 : index
    %18 = vector.load %arg6[%c0_15, %c0_16] : memref<256x128xf32, #tpu.memory_space<vmem>>, vector<256x128xf32>
    %cst_17 = arith.constant dense<0.000000e+00> : vector<8x128xf32>
    %19 = tpu.matmul %17, %18, %cst_17 {dimension_numbers = #tpu.dot_dimension_numbers<[1], [0], [0], [1], [0, 0, 1, 1], [], []>} : vector<8x256xf32>, vector<256x128xf32>, vector<8x128xf32> -> vector<8x128xf32>
    %c0_18 = arith.constant 0 : index
    %c0_19 = arith.constant 0 : index
    %20 = vector.load %arg7[%c0_18, %c0_19] : memref<1x128xf32, #tpu.memory_space<vmem>>, vector<1x128xf32>
    %21 = vector.broadcast %20 : vector<1x128xf32> to vector<8x128xf32>
    %22 = arith.addf %19, %21 : vector<8x128xf32>
    %c0_20 = arith.constant 0 : index
    %c0_21 = arith.constant 0 : index
    %23 = vector.load %arg8[%c0_20, %c0_21] : memref<8x128xf32, #tpu.memory_space<vmem>>, vector<8x128xf32>
    tpu.vector_store %arg8[%c0_20, %c0_21], %22 {strides = array<i32>} : memref<8x128xf32, #tpu.memory_space<vmem>>, vector<8x128xf32>,
    return
  }
  func.func @transform_0(%arg0: i32) -> (i32, i32, i32) {
    %c0_i32 = arith.constant 0 : i32
    %c0_i32_0 = arith.constant 0 : i32
    %c0_i32_1 = arith.constant 0 : i32
    return %arg0, %c0_i32, %c0_i32_0 : i32, i32, i32
  }
  func.func @transform_1(%arg0: i32) -> (i32, i32) {
    %c0_i32 = arith.constant 0 : i32
    %c0_i32_0 = arith.constant 0 : i32
    %c0_i32_1 = arith.constant 0 : i32
    return %c0_i32, %c0_i32_0 : i32, i32
  }
  func.func @transform_2(%arg0: i32) -> (i32, i32) {
    %c0_i32 = arith.constant 0 : i32
    %c0_i32_0 = arith.constant 0 : i32
    %c0_i32_1 = arith.constant 0 : i32
    return %c0_i32, %c0_i32_0 : i32, i32
  }
  func.func @transform_3(%arg0: i32) -> (i32, i32) {
    %c0_i32 = arith.constant 0 : i32
    %c0_i32_0 = arith.constant 0 : i32
    %c0_i32_1 = arith.constant 0 : i32
    return %c0_i32, %c0_i32_0 : i32, i32
  }
  func.func @transform_4(%arg0: i32) -> (i32, i32) {
    %c0_i32 = arith.constant 0 : i32
    %c0_i32_0 = arith.constant 0 : i32
    %c0_i32_1 = arith.constant 0 : i32
    return %c0_i32, %c0_i32_0 : i32, i32
  }
  func.func @transform_5(%arg0: i32) -> (i32, i32) {
    %c0_i32 = arith.constant 0 : i32
    %c0_i32_0 = arith.constant 0 : i32
    %c0_i32_1 = arith.constant 0 : i32
    return %c0_i32, %c0_i32_0 : i32, i32
  }
  func.func @transform_6(%arg0: i32) -> (i32, i32) {
    %c0_i32 = arith.constant 0 : i32
    %c0_i32_0 = arith.constant 0 : i32
    %c0_i32_1 = arith.constant 0 : i32
    return %c0_i32, %c0_i32_0 : i32, i32
  }
  func.func @transform_7(%arg0: i32) -> (i32, i32) {
    %c0_i32 = arith.constant 0 : i32
    %c0_i32_0 = arith.constant 0 : i32
    return %arg0, %c0_i32 : i32, i32
  }
}

</mosaic_0001>

<llo_original>
// kernel: tpu_custom_call.1
$region0: #{tpu_custom_call.1}
  #allocation0 [shape = 'u32[]', space=smem, size = 0x4, offset = 0x4, fixed_abs, tag = 'smem constant byte address 0x4 - core index']
  #allocation1 [shape = 'u32[72,128]{1,0:T(1,128)}', space=vmem, size = 0x9000, scoped, tag = 'internal scratch']
  %s0 = inlined_call_operand.hbm [shape: f32[8,16,512], index: 0, kind: input, shape index: {}]
  %s1 = inlined_call_operand.hbm [shape: f32[512,256], index: 1, kind: input, shape index: {}]
  %s2 = inlined_call_operand.hbm [shape: f32[1,256], index: 2, kind: input, shape index: {}]
  %s3 = inlined_call_operand.hbm [shape: f32[256,256], index: 3, kind: input, shape index: {}]
  %s4 = inlined_call_operand.vmem [shape: f32[1,256], index: 4, kind: input, shape index: {}]
  %s5 = inlined_call_operand.hbm [shape: f32[256,128], index: 5, kind: input, shape index: {}]
  %s6 = inlined_call_operand.vmem [shape: f32[1,128], index: 6, kind: input, shape index: {}]
  %s7 = inlined_call_operand.hbm [shape: f32[8,128], index: 7, kind: output, shape index: {}]
  %s8 = sld [smem:[#allocation0]]
  $region58: #{tpu_custom_call.1} parent=0
    _
  %s10 = ssub.s32 1, %s8
  %s11 = scalar_select 0, %s10, %s8
  $region1: #{tpu_custom_call.1} parent=0
    #allocation2 [shape = 'u8[262144]{0}', space=vmem, size = 0x40000, scoped, tag = 'input window, operand 0, single buffered']
    #allocation3 [shape = 's32[1]{0}', space=sflag, size = 0x4, scoped, tag = 'scoped memory for tpu_custom_call.1']
    #allocation4 [shape = 's32[1]{0}', space=sflag, size = 0x4, scoped, tag = 'scoped memory for tpu_custom_call.1']
    #allocation5 [shape = 'u8[524288]{0}', space=vmem, size = 0x80000, scoped, tag = 'input window, operand 1, single buffered']
    #allocation6 [shape = 's32[1]{0}', space=sflag, size = 0x4, scoped, tag = 'scoped memory for tpu_custom_call.1']
    #allocation7 [shape = 'u8[1024]{0}', space=vmem, size = 0x400, scoped, tag = 'input window, operand 2, single buffered']
    #allocation8 [shape = 'u8[262144]{0}', space=vmem, size = 0x40000, scoped, tag = 'input window, operand 3, single buffered']
    #allocation9 [shape = 's32[1]{0}', space=sflag, size = 0x4, scoped, tag = 'scoped memory for tpu_custom_call.1']
    #allocation10 [shape = 'u8[131072]{0}', space=vmem, size = 0x20000, scoped, tag = 'input window, operand 5, single buffered']
    #allocation11 [shape = 'u8[4096]{0}', space=vmem, size = 0x1000, scoped, tag = 'output window, operand 0, single buffered']
    %12 = vsyncpa [#allocation3], 0
    %13 = vsyncpa [#allocation6], 0
    %14 = vsyncpa [#allocation9], 0
    %15 = vsyncpa [#allocation4], 0
    // Predicated region
    $region2: #{tpu_custom_call.1} parent=1 // pred_check
      _
    $region3: #{tpu_custom_call.1} parent=1 // pred_check_branch
      %17 = sbr.rel (0) target = $region5
    $region4: #{tpu_custom_call.1} parent=1 // pred_region
      %19 = vsyncadd [#allocation3], 0
      %s20 = sshll.u32 %s0, 4
      %s21 = int_to_ptr.hbm [resolvable:$true] %s20
      %s22 = sshll.u32 [#allocation2], 4
      %s23 = int_to_ptr.vmem [resolvable:$true] %s22
      %28 = dma.hbm_to_vmem [thread:$0]  %s21, 8192, %s23, [#allocation3], 512, 512, 32
    $region5: #{tpu_custom_call.1} parent=1 // pred_fallthru
      _
    // Predicated region
    $region6: #{tpu_custom_call.1} parent=1 // pred_check
      _
    $region7: #{tpu_custom_call.1} parent=1 // pred_check_branch
      %30 = sbr.rel (0) target = $region9
    $region8: #{tpu_custom_call.1} parent=1 // pred_region
      %32 = vsyncadd [#allocation6], 0
      %s33 = sshll.u32 %s1, 4
      %s34 = int_to_ptr.hbm [resolvable:$true] %s33
      %s35 = sshll.u32 [#allocation5], 4
      %s36 = int_to_ptr.vmem [resolvable:$true] %s35
      %41 = dma.hbm_to_vmem [thread:$0]  %s34, 16384, %s36, [#allocation6], 256, 256, 16
    $region9: #{tpu_custom_call.1} parent=1 // pred_fallthru
      _
    // Predicated region
    $region10: #{tpu_custom_call.1} parent=1 // pred_check
      _
    $region11: #{tpu_custom_call.1} parent=1 // pred_check_branch
      %43 = sbr.rel (0) target = $region13
    $region12: #{tpu_custom_call.1} parent=1 // pred_region
      %45 = vsyncadd [#allocation6], 0
      %s47 = sshll.u32 %s2, 4
      %s48 = int_to_ptr.hbm [resolvable:$true] %s47
      %s49 = sshll.u32 [#allocation7], 4
      %s50 = int_to_ptr.vmem [resolvable:$true] %s49
      %52 = dma.hbm_to_vmem [thread:$0]  %s48, 32, %s50, [#allocation6]
    $region13: #{tpu_custom_call.1} parent=1 // pred_fallthru
      _
    // Predicated region
    $region14: #{tpu_custom_call.1} parent=1 // pred_check
      _
    $region15: #{tpu_custom_call.1} parent=1 // pred_check_branch
      %54 = sbr.rel (0) target = $region17
    $region16: #{tpu_custom_call.1} parent=1 // pred_region
      %56 = vsyncadd [#allocation9], 0
      %s57 = sshll.u32 %s3, 4
      %s58 = int_to_ptr.hbm [resolvable:$true] %s57
      %s59 = sshll.u32 [#allocation8], 4
      %s60 = int_to_ptr.vmem [resolvable:$true] %s59
      %65 = dma.hbm_to_vmem [thread:$0]  %s58, 8192, %s60, [#allocation9], 256, 256, 16
    $region17: #{tpu_custom_call.1} parent=1 // pred_fallthru
      _
    // Predicated region
    $region18: #{tpu_custom_call.1} parent=1 // pred_check
      _
    $region19: #{tpu_custom_call.1} parent=1 // pred_check_branch
      %67 = sbr.rel (0) target = $region21
    $region20: #{tpu_custom_call.1} parent=1 // pred_region
      _
    $region21: #{tpu_custom_call.1} parent=1 // pred_fallthru
      _
    // Predicated region
    $region22: #{tpu_custom_call.1} parent=1 // pred_check
      _
    $region23: #{tpu_custom_call.1} parent=1 // pred_check_branch
      %69 = sbr.rel (0) target = $region25
    $region24: #{tpu_custom_call.1} parent=1 // pred_region
      %71 = vsyncadd [#allocation9], 0
      %s72 = sshll.u32 %s5, 4
      %s73 = int_to_ptr.hbm [resolvable:$true] %s72
      %s74 = sshll.u32 [#allocation10], 4
      %s75 = int_to_ptr.vmem [resolvable:$true] %s74
      %80 = dma.hbm_to_vmem [thread:$0]  %s73, 4096, %s75, [#allocation9], 128, 128, 8
    $region25: #{tpu_custom_call.1} parent=1 // pred_fallthru
      _
    // Predicated region
    $region26: #{tpu_custom_call.1} parent=1 // pred_check
      _
    $region27: #{tpu_custom_call.1} parent=1 // pred_check_branch
      %82 = sbr.rel (0) target = $region29
    $region28: #{tpu_custom_call.1} parent=1 // pred_region
      _
    $region29: #{tpu_custom_call.1} parent=1 // pred_fallthru
      _
    // Predicated region
    $region30: #{tpu_custom_call.1} parent=1 // pred_check
      _
    $region31: #{tpu_custom_call.1} parent=1 // pred_check_branch
      %84 = sbr.rel (0) target = $region33
    $region32: #{tpu_custom_call.1} parent=1 // pred_region
      %86 = dma.done [#allocation3], 8192
    $region33: #{tpu_custom_call.1} parent=1 // pred_fallthru
      _
    // Predicated region
    $region34: #{tpu_custom_call.1} parent=1 // pred_check
      _
    $region35: #{tpu_custom_call.1} parent=1 // pred_check_branch
      %88 = sbr.rel (0) target = $region37
    $region36: #{tpu_custom_call.1} parent=1 // pred_region
      %90 = dma.done [#allocation6], 16384
    $region37: #{tpu_custom_call.1} parent=1 // pred_fallthru
      _
    // Predicated region
    $region38: #{tpu_custom_call.1} parent=1 // pred_check
      _
    $region39: #{tpu_custom_call.1} parent=1 // pred_check_branch
      %92 = sbr.rel (0) target = $region41
    $region40: #{tpu_custom_call.1} parent=1 // pred_region
      %94 = dma.done [#allocation6], 32
    $region41: #{tpu_custom_call.1} parent=1 // pred_fallthru
      _
    // Predicated region
    $region42: #{tpu_custom_call.1} parent=1 // pred_check
      _
    $region43: #{tpu_custom_call.1} parent=1 // pred_check_branch
      %96 = sbr.rel (0) target = $region45
    $region44: #{tpu_custom_call.1} parent=1 // pred_region
      %98 = dma.done [#allocation9], 8192
    $region45: #{tpu_custom_call.1} parent=1 // pred_fallthru
      _
    // Predicated region
    $region46: #{tpu_custom_call.1} parent=1 // pred_check
      _
    $region47: #{tpu_custom_call.1} parent=1 // pred_check_branch
      %100 = sbr.rel (0) target = $region49
    $region48: #{tpu_custom_call.1} parent=1 // pred_region
      %102 = dma.done [#allocation9], 4096
    $region49: #{tpu_custom_call.1} parent=1 // pred_fallthru
      _
    %v103 = vld [vmem:[#allocation2] sm:$0xff]
    %v104 = vld [vmem:[#allocation2 + $0x8] sm:$0xff]
    %v105 = vld [vmem:[#allocation2 + $0x10] sm:$0xff]
    %v106 = vld [vmem:[#allocation2 + $0x18] sm:$0xff]
    %v107 = vld [vmem:[#allocation2 + $0x20] sm:$0xff]
    %v108 = vld [vmem:[#allocation2 + $0x28] sm:$0xff]
    %v109 = vld [vmem:[#allocation2 + $0x30] sm:$0xff]
    %v110 = vld [vmem:[#allocation2 + $0x38] sm:$0xff]
    %v111 = vld [vmem:[#allocation2 + $0x40] sm:$0xff]
    %v112 = vld [vmem:[#allocation2 + $0x48] sm:$0xff]
    %v113 = vld [vmem:[#allocation2 + $0x50] sm:$0xff]
    %v114 = vld [vmem:[#allocation2 + $0x58] sm:$0xff]
    %v115 = vld [vmem:[#allocation2 + $0x60] sm:$0xff]
    %v116 = vld [vmem:[#allocation2 + $0x68] sm:$0xff]
    %v117 = vld [vmem:[#allocation2 + $0x70] sm:$0xff]
    %v118 = vld [vmem:[#allocation2 + $0x78] sm:$0xff]
    %v119 = vld [vmem:[#allocation2 + $0x80] sm:$0xff]
    %v120 = vld [vmem:[#allocation2 + $0x88] sm:$0xff]
    %v121 = vld [vmem:[#allocation2 + $0x90] sm:$0xff]
    %v122 = vld [vmem:[#allocation2 + $0x98] sm:$0xff]
    %v123 = vld [vmem:[#allocation2 + $0xa0] sm:$0xff]
    %v124 = vld [vmem:[#allocation2 + $0xa8] sm:$0xff]
    %v125 = vld [vmem:[#allocation2 + $0xb0] sm:$0xff]
    %v126 = vld [vmem:[#allocation2 + $0xb8] sm:$0xff]
    %v127 = vld [vmem:[#allocation2 + $0xc0] sm:$0xff]
    %v128 = vld [vmem:[#allocation2 + $0xc8] sm:$0xff]
    %v129 = vld [vmem:[#allocation2 + $0xd0] sm:$0xff]
    %v130 = vld [vmem:[#allocation2 + $0xd8] sm:$0xff]
    %v131 = vld [vmem:[#allocation2 + $0xe0] sm:$0xff]
    %v132 = vld [vmem:[#allocation2 + $0xe8] sm:$0xff]
    %v133 = vld [vmem:[#allocation2 + $0xf0] sm:$0xff]
    %v134 = vld [vmem:[#allocation2 + $0xf8] sm:$0xff]
    %v135 = vld [vmem:[#allocation2 + $0x100] sm:$0xff]
    %v136 = vld [vmem:[#allocation2 + $0x108] sm:$0xff]
    %v137 = vld [vmem:[#allocation2 + $0x110] sm:$0xff]
    %v138 = vld [vmem:[#allocation2 + $0x118] sm:$0xff]
    %v139 = vld [vmem:[#allocation2 + $0x120] sm:$0xff]
    %v140 = vld [vmem:[#allocation2 + $0x128] sm:$0xff]
    %v141 = vld [vmem:[#allocation2 + $0x130] sm:$0xff]
    %v142 = vld [vmem:[#allocation2 + $0x138] sm:$0xff]
    %v143 = vld [vmem:[#allocation2 + $0x140] sm:$0xff]
    %v144 = vld [vmem:[#allocation2 + $0x148] sm:$0xff]
    %v145 = vld [vmem:[#allocation2 + $0x150] sm:$0xff]
    %v146 = vld [vmem:[#allocation2 + $0x158] sm:$0xff]
    %v147 = vld [vmem:[#allocation2 + $0x160] sm:$0xff]
    %v148 = vld [vmem:[#allocation2 + $0x168] sm:$0xff]
    %v149 = vld [vmem:[#allocation2 + $0x170] sm:$0xff]
    %v150 = vld [vmem:[#allocation2 + $0x178] sm:$0xff]
    %v151 = vld [vmem:[#allocation2 + $0x180] sm:$0xff]
    %v152 = vld [vmem:[#allocation2 + $0x188] sm:$0xff]
    %v153 = vld [vmem:[#allocation2 + $0x190] sm:$0xff]
    %v154 = vld [vmem:[#allocation2 + $0x198] sm:$0xff]
    %v155 = vld [vmem:[#allocation2 + $0x1a0] sm:$0xff]
    %v156 = vld [vmem:[#allocation2 + $0x1a8] sm:$0xff]
    %v157 = vld [vmem:[#allocation2 + $0x1b0] sm:$0xff]
    %v158 = vld [vmem:[#allocation2 + $0x1b8] sm:$0xff]
    %v159 = vld [vmem:[#allocation2 + $0x1c0] sm:$0xff]
    %v160 = vld [vmem:[#allocation2 + $0x1c8] sm:$0xff]
    %v161 = vld [vmem:[#allocation2 + $0x1d0] sm:$0xff]
    %v162 = vld [vmem:[#allocation2 + $0x1d8] sm:$0xff]
    %v163 = vld [vmem:[#allocation2 + $0x1e0] sm:$0xff]
    %v164 = vld [vmem:[#allocation2 + $0x1e8] sm:$0xff]
    %v165 = vld [vmem:[#allocation2 + $0x1f0] sm:$0xff]
    %v166 = vld [vmem:[#allocation2 + $0x1f8] sm:$0xff]
    %v167 = vadd.f32 %v103, %v107
    %v168 = vrot.slane %v167, 4
    %v169 = vadd.f32 %v167, %v168
    %v170 = vrot.slane %v169, 2
    %v171 = vadd.f32 %v169, %v170
    %v172 = vrot.slane %v171, 1
    %v173 = vadd.f32 %v171, %v172
    %v174 = vadd.f32 %v104, %v108
    %v175 = vrot.slane %v174, 4
    %v176 = vadd.f32 %v174, %v175
    %v177 = vrot.slane %v176, 2
    %v178 = vadd.f32 %v176, %v177
    %v179 = vrot.slane %v178, 1
    %v180 = vadd.f32 %v178, %v179
    %v181 = vadd.f32 %v105, %v109
    %v182 = vrot.slane %v181, 4
    %v183 = vadd.f32 %v181, %v182
    %v184 = vrot.slane %v183, 2
    %v185 = vadd.f32 %v183, %v184
    %v186 = vrot.slane %v185, 1
    %v187 = vadd.f32 %v185, %v186
    %v188 = vadd.f32 %v106, %v110
    %v189 = vrot.slane %v188, 4
    %v190 = vadd.f32 %v188, %v189
    %v191 = vrot.slane %v190, 2
    %v192 = vadd.f32 %v190, %v191
    %v193 = vrot.slane %v192, 1
    %v194 = vadd.f32 %v192, %v193
    %v195 = vadd.f32 %v111, %v115
    %v196 = vrot.slane %v195, 4
    %v197 = vadd.f32 %v195, %v196
    %v198 = vrot.slane %v197, 2
    %v199 = vadd.f32 %v197, %v198
    %v200 = vrot.slane %v199, 1
    %v201 = vadd.f32 %v199, %v200
    %v202 = vadd.f32 %v112, %v116
    %v203 = vrot.slane %v202, 4
    %v204 = vadd.f32 %v202, %v203
    %v205 = vrot.slane %v204, 2
    %v206 = vadd.f32 %v204, %v205
    %v207 = vrot.slane %v206, 1
    %v208 = vadd.f32 %v206, %v207
    %v209 = vadd.f32 %v113, %v117
    %v210 = vrot.slane %v209, 4
    %v211 = vadd.f32 %v209, %v210
    %v212 = vrot.slane %v211, 2
    %v213 = vadd.f32 %v211, %v212
    %v214 = vrot.slane %v213, 1
    %v215 = vadd.f32 %v213, %v214
    %v216 = vadd.f32 %v114, %v118
    %v217 = vrot.slane %v216, 4
    %v218 = vadd.f32 %v216, %v217
    %v219 = vrot.slane %v218, 2
    %v220 = vadd.f32 %v218, %v219
    %v221 = vrot.slane %v220, 1
    %v222 = vadd.f32 %v220, %v221
    %v223 = vadd.f32 %v119, %v123
    %v224 = vrot.slane %v223, 4
    %v225 = vadd.f32 %v223, %v224
    %v226 = vrot.slane %v225, 2
    %v227 = vadd.f32 %v225, %v226
    %v228 = vrot.slane %v227, 1
    %v229 = vadd.f32 %v227, %v228
    %v230 = vadd.f32 %v120, %v124
    %v231 = vrot.slane %v230, 4
    %v232 = vadd.f32 %v230, %v231
    %v233 = vrot.slane %v232, 2
    %v234 = vadd.f32 %v232, %v233
    %v235 = vrot.slane %v234, 1
    %v236 = vadd.f32 %v234, %v235
    %v237 = vadd.f32 %v121, %v125
    %v238 = vrot.slane %v237, 4
    %v239 = vadd.f32 %v237, %v238
    %v240 = vrot.slane %v239, 2
    %v241 = vadd.f32 %v239, %v240
    %v242 = vrot.slane %v241, 1
    %v243 = vadd.f32 %v241, %v242
    %v244 = vadd.f32 %v122, %v126
    %v245 = vrot.slane %v244, 4
    %v246 = vadd.f32 %v244, %v245
    %v247 = vrot.slane %v246, 2
    %v248 = vadd.f32 %v246, %v247
    %v249 = vrot.slane %v248, 1
    %v250 = vadd.f32 %v248, %v249
    %v251 = vadd.f32 %v127, %v131
    %v252 = vrot.slane %v251, 4
    %v253 = vadd.f32 %v251, %v252
    %v254 = vrot.slane %v253, 2
    %v255 = vadd.f32 %v253, %v254
    %v256 = vrot.slane %v255, 1
    %v257 = vadd.f32 %v255, %v256
    %v258 = vadd.f32 %v128, %v132
    %v259 = vrot.slane %v258, 4
    %v260 = vadd.f32 %v258, %v259
    %v261 = vrot.slane %v260, 2
    %v262 = vadd.f32 %v260, %v261
    %v263 = vrot.slane %v262, 1
    %v264 = vadd.f32 %v262, %v263
    %v265 = vadd.f32 %v129, %v133
    %v266 = vrot.slane %v265, 4
    %v267 = vadd.f32 %v265, %v266
    %v268 = vrot.slane %v267, 2
    %v269 = vadd.f32 %v267, %v268
    %v270 = vrot.slane %v269, 1
    %v271 = vadd.f32 %v269, %v270
    %v272 = vadd.f32 %v130, %v134
    %v273 = vrot.slane %v272, 4
    %v274 = vadd.f32 %v272, %v273
    %v275 = vrot.slane %v274, 2
    %v276 = vadd.f32 %v274, %v275
    %v277 = vrot.slane %v276, 1
    %v278 = vadd.f32 %v276, %v277
    %v279 = vadd.f32 %v135, %v139
    %v280 = vrot.slane %v279, 4
    %v281 = vadd.f32 %v279, %v280
    %v282 = vrot.slane %v281, 2
    %v283 = vadd.f32 %v281, %v282
    %v284 = vrot.slane %v283, 1
    %v285 = vadd.f32 %v283, %v284
    %v286 = vadd.f32 %v136, %v140
    %v287 = vrot.slane %v286, 4
    %v288 = vadd.f32 %v286, %v287
    %v289 = vrot.slane %v288, 2
    %v290 = vadd.f32 %v288, %v289
    %v291 = vrot.slane %v290, 1
    %v292 = vadd.f32 %v290, %v291
    %v293 = vadd.f32 %v137, %v141
    %v294 = vrot.slane %v293, 4
    %v295 = vadd.f32 %v293, %v294
    %v296 = vrot.slane %v295, 2
    %v297 = vadd.f32 %v295, %v296
    %v298 = vrot.slane %v297, 1
    %v299 = vadd.f32 %v297, %v298
    %v300 = vadd.f32 %v138, %v142
    %v301 = vrot.slane %v300, 4
    %v302 = vadd.f32 %v300, %v301
    %v303 = vrot.slane %v302, 2
    %v304 = vadd.f32 %v302, %v303
    %v305 = vrot.slane %v304, 1
    %v306 = vadd.f32 %v304, %v305
    %v307 = vadd.f32 %v143, %v147
    %v308 = vrot.slane %v307, 4
    %v309 = vadd.f32 %v307, %v308
    %v310 = vrot.slane %v309, 2
    %v311 = vadd.f32 %v309, %v310
    %v312 = vrot.slane %v311, 1
    %v313 = vadd.f32 %v311, %v312
    %v314 = vadd.f32 %v144, %v148
    %v315 = vrot.slane %v314, 4
    %v316 = vadd.f32 %v314, %v315
    %v317 = vrot.slane %v316, 2
    %v318 = vadd.f32 %v316, %v317
    %v319 = vrot.slane %v318, 1
    %v320 = vadd.f32 %v318, %v319
    %v321 = vadd.f32 %v145, %v149
    %v322 = vrot.slane %v321, 4
    %v323 = vadd.f32 %v321, %v322
    %v324 = vrot.slane %v323, 2
    %v325 = vadd.f32 %v323, %v324
    %v326 = vrot.slane %v325, 1
    %v327 = vadd.f32 %v325, %v326
    %v328 = vadd.f32 %v146, %v150
    %v329 = vrot.slane %v328, 4
    %v330 = vadd.f32 %v328, %v329
    %v331 = vrot.slane %v330, 2
    %v332 = vadd.f32 %v330, %v331
    %v333 = vrot.slane %v332, 1
    %v334 = vadd.f32 %v332, %v333
    %v335 = vadd.f32 %v151, %v155
    %v336 = vrot.slane %v335, 4
    %v337 = vadd.f32 %v335, %v336
    %v338 = vrot.slane %v337, 2
    %v339 = vadd.f32 %v337, %v338
    %v340 = vrot.slane %v339, 1
    %v341 = vadd.f32 %v339, %v340
    %v342 = vadd.f32 %v152, %v156
    %v343 = vrot.slane %v342, 4
    %v344 = vadd.f32 %v342, %v343
    %v345 = vrot.slane %v344, 2
    %v346 = vadd.f32 %v344, %v345
    %v347 = vrot.slane %v346, 1
    %v348 = vadd.f32 %v346, %v347
    %v349 = vadd.f32 %v153, %v157
    %v350 = vrot.slane %v349, 4
    %v351 = vadd.f32 %v349, %v350
    %v352 = vrot.slane %v351, 2
    %v353 = vadd.f32 %v351, %v352
    %v354 = vrot.slane %v353, 1
    %v355 = vadd.f32 %v353, %v354
    %v356 = vadd.f32 %v154, %v158
    %v357 = vrot.slane %v356, 4
    %v358 = vadd.f32 %v356, %v357
    %v359 = vrot.slane %v358, 2
    %v360 = vadd.f32 %v358, %v359
    %v361 = vrot.slane %v360, 1
    %v362 = vadd.f32 %v360, %v361
    %v363 = vadd.f32 %v159, %v163
    %v364 = vrot.slane %v363, 4
    %v365 = vadd.f32 %v363, %v364
    %v366 = vrot.slane %v365, 2
    %v367 = vadd.f32 %v365, %v366
    %v368 = vrot.slane %v367, 1
    %v369 = vadd.f32 %v367, %v368
    %v370 = vadd.f32 %v160, %v164
    %v371 = vrot.slane %v370, 4
    %v372 = vadd.f32 %v370, %v371
    %v373 = vrot.slane %v372, 2
    %v374 = vadd.f32 %v372, %v373
    %v375 = vrot.slane %v374, 1
    %v376 = vadd.f32 %v374, %v375
    %v377 = vadd.f32 %v161, %v165
    %v378 = vrot.slane %v377, 4
    %v379 = vadd.f32 %v377, %v378
    %v380 = vrot.slane %v379, 2
    %v381 = vadd.f32 %v379, %v380
    %v382 = vrot.slane %v381, 1
    %v383 = vadd.f32 %v381, %v382
    %v384 = vadd.f32 %v162, %v166
    %v385 = vrot.slane %v384, 4
    %v386 = vadd.f32 %v384, %v385
    %v387 = vrot.slane %v386, 2
    %v388 = vadd.f32 %v386, %v387
    %v389 = vrot.slane %v388, 1
    %v390 = vadd.f32 %v388, %v389
    %v391 = vmul.f32 %v173, 0.0625
    %v392 = vmul.f32 %v180, 0.0625
    %v393 = vmul.f32 %v187, 0.0625
    %v394 = vmul.f32 %v194, 0.0625
    %v395 = vmul.f32 %v201, 0.0625
    %v396 = vmul.f32 %v208, 0.0625
    %v397 = vmul.f32 %v215, 0.0625
    %v398 = vmul.f32 %v222, 0.0625
    %v399 = vmul.f32 %v229, 0.0625
    %v400 = vmul.f32 %v236, 0.0625
    %v401 = vmul.f32 %v243, 0.0625
    %v402 = vmul.f32 %v250, 0.0625
    %v403 = vmul.f32 %v257, 0.0625
    %v404 = vmul.f32 %v264, 0.0625
    %v405 = vmul.f32 %v271, 0.0625
    %v406 = vmul.f32 %v278, 0.0625
    %v407 = vmul.f32 %v285, 0.0625
    %v408 = vmul.f32 %v292, 0.0625
    %v409 = vmul.f32 %v299, 0.0625
    %v410 = vmul.f32 %v306, 0.0625
    %v411 = vmul.f32 %v313, 0.0625
    %v412 = vmul.f32 %v320, 0.0625
    %v413 = vmul.f32 %v327, 0.0625
    %v414 = vmul.f32 %v334, 0.0625
    %v415 = vmul.f32 %v341, 0.0625
    %v416 = vmul.f32 %v348, 0.0625
    %v417 = vmul.f32 %v355, 0.0625
    %v418 = vmul.f32 %v362, 0.0625
    %v419 = vmul.f32 %v369, 0.0625
    %v420 = vmul.f32 %v376, 0.0625
    %v421 = vmul.f32 %v383, 0.0625
    %v422 = vmul.f32 %v390, 0.0625
    %v423 = vld [vmem:[#allocation5] sm:$0xff]
    %v424 = vld [vmem:[#allocation5 + $0x8] sm:$0xff]
    %v425 = vld [vmem:[#allocation5 + $0x10] sm:$0xff]
    %v426 = vld [vmem:[#allocation5 + $0x18] sm:$0xff]
    %v427 = vld [vmem:[#allocation5 + $0x20] sm:$0xff]
    %v428 = vld [vmem:[#allocation5 + $0x28] sm:$0xff]
    %v429 = vld [vmem:[#allocation5 + $0x30] sm:$0xff]
    %v430 = vld [vmem:[#allocation5 + $0x38] sm:$0xff]
    %v431 = vld [vmem:[#allocation5 + $0x40] sm:$0xff]
    %v432 = vld [vmem:[#allocation5 + $0x48] sm:$0xff]
    %v433 = vld [vmem:[#allocation5 + $0x50] sm:$0xff]
    %v434 = vld [vmem:[#allocation5 + $0x58] sm:$0xff]
    %v435 = vld [vmem:[#allocation5 + $0x60] sm:$0xff]
    %v436 = vld [vmem:[#allocation5 + $0x68] sm:$0xff]
    %v437 = vld [vmem:[#allocation5 + $0x70] sm:$0xff]
    %v438 = vld [vmem:[#allocation5 + $0x78] sm:$0xff]
    %v439 = vld [vmem:[#allocation5 + $0x80] sm:$0xff]
    %v440 = vld [vmem:[#allocation5 + $0x88] sm:$0xff]
    %v441 = vld [vmem:[#allocation5 + $0x90] sm:$0xff]
    %v442 = vld [vmem:[#allocation5 + $0x98] sm:$0xff]
    %v443 = vld [vmem:[#allocation5 + $0xa0] sm:$0xff]
    %v444 = vld [vmem:[#allocation5 + $0xa8] sm:$0xff]
    %v445 = vld [vmem:[#allocation5 + $0xb0] sm:$0xff]
    %v446 = vld [vmem:[#allocation5 + $0xb8] sm:$0xff]
    %v447 = vld [vmem:[#allocation5 + $0xc0] sm:$0xff]
    %v448 = vld [vmem:[#allocation5 + $0xc8] sm:$0xff]
    %v449 = vld [vmem:[#allocation5 + $0xd0] sm:$0xff]
    %v450 = vld [vmem:[#allocation5 + $0xd8] sm:$0xff]
    %v451 = vld [vmem:[#allocation5 + $0xe0] sm:$0xff]
    %v452 = vld [vmem:[#allocation5 + $0xe8] sm:$0xff]
    %v453 = vld [vmem:[#allocation5 + $0xf0] sm:$0xff]
    %v454 = vld [vmem:[#allocation5 + $0xf8] sm:$0xff]
    %v455 = vld [vmem:[#allocation5 + $0x100] sm:$0xff]
    %v456 = vld [vmem:[#allocation5 + $0x108] sm:$0xff]
    %v457 = vld [vmem:[#allocation5 + $0x110] sm:$0xff]
    %v458 = vld [vmem:[#allocation5 + $0x118] sm:$0xff]
    %v459 = vld [vmem:[#allocation5 + $0x120] sm:$0xff]
    %v460 = vld [vmem:[#allocation5 + $0x128] sm:$0xff]
    %v461 = vld [vmem:[#allocation5 + $0x130] sm:$0xff]
    %v462 = vld [vmem:[#allocation5 + $0x138] sm:$0xff]
    %v463 = vld [vmem:[#allocation5 + $0x140] sm:$0xff]
    %v464 = vld [vmem:[#allocation5 + $0x148] sm:$0xff]
    %v465 = vld [vmem:[#allocation5 + $0x150] sm:$0xff]
    %v466 = vld [vmem:[#allocation5 + $0x158] sm:$0xff]
    %v467 = vld [vmem:[#allocation5 + $0x160] sm:$0xff]
    %v468 = vld [vmem:[#allocation5 + $0x168] sm:$0xff]
    %v469 = vld [vmem:[#allocation5 + $0x170] sm:$0xff]
    %v470 = vld [vmem:[#allocation5 + $0x178] sm:$0xff]
    %v471 = vld [vmem:[#allocation5 + $0x180] sm:$0xff]
    %v472 = vld [vmem:[#allocation5 + $0x188] sm:$0xff]
    %v473 = vld [vmem:[#allocation5 + $0x190] sm:$0xff]
    %v474 = vld [vmem:[#allocation5 + $0x198] sm:$0xff]
    %v475 = vld [vmem:[#allocation5 + $0x1a0] sm:$0xff]
    %v476 = vld [vmem:[#allocation5 + $0x1a8] sm:$0xff]
    %v477 = vld [vmem:[#allocation5 + $0x1b0] sm:$0xff]
    %v478 = vld [vmem:[#allocation5 + $0x1b8] sm:$0xff]
    %v479 = vld [vmem:[#allocation5 + $0x1c0] sm:$0xff]
    %v480 = vld [vmem:[#allocation5 + $0x1c8] sm:$0xff]
    %v481 = vld [vmem:[#allocation5 + $0x1d0] sm:$0xff]
    %v482 = vld [vmem:[#allocation5 + $0x1d8] sm:$0xff]
    %v483 = vld [vmem:[#allocation5 + $0x1e0] sm:$0xff]
    %v484 = vld [vmem:[#allocation5 + $0x1e8] sm:$0xff]
    %v485 = vld [vmem:[#allocation5 + $0x1f0] sm:$0xff]
    %v486 = vld [vmem:[#allocation5 + $0x1f8] sm:$0xff]
    %v487 = vld [vmem:[#allocation5 + $0x200] sm:$0xff]
    %v488 = vld [vmem:[#allocation5 + $0x208] sm:$0xff]
    %v489 = vld [vmem:[#allocation5 + $0x210] sm:$0xff]
    %v490 = vld [vmem:[#allocation5 + $0x218] sm:$0xff]
    %v491 = vld [vmem:[#allocation5 + $0x220] sm:$0xff]
    %v492 = vld [vmem:[#allocation5 + $0x228] sm:$0xff]
    %v493 = vld [vmem:[#allocation5 + $0x230] sm:$0xff]
    %v494 = vld [vmem:[#allocation5 + $0x238] sm:$0xff]
    %v495 = vld [vmem:[#allocation5 + $0x240] sm:$0xff]
    %v496 = vld [vmem:[#allocation5 + $0x248] sm:$0xff]
    %v497 = vld [vmem:[#allocation5 + $0x250] sm:$0xff]
    %v498 = vld [vmem:[#allocation5 + $0x258] sm:$0xff]
    %v499 = vld [vmem:[#allocation5 + $0x260] sm:$0xff]
    %v500 = vld [vmem:[#allocation5 + $0x268] sm:$0xff]
    %v501 = vld [vmem:[#allocation5 + $0x270] sm:$0xff]
    %v502 = vld [vmem:[#allocation5 + $0x278] sm:$0xff]
    %v503 = vld [vmem:[#allocation5 + $0x280] sm:$0xff]
    %v504 = vld [vmem:[#allocation5 + $0x288] sm:$0xff]
    %v505 = vld [vmem:[#allocation5 + $0x290] sm:$0xff]
    %v506 = vld [vmem:[#allocation5 + $0x298] sm:$0xff]
    %v507 = vld [vmem:[#allocation5 + $0x2a0] sm:$0xff]
    %v508 = vld [vmem:[#allocation5 + $0x2a8] sm:$0xff]
    %v509 = vld [vmem:[#allocation5 + $0x2b0] sm:$0xff]
    %v510 = vld [vmem:[#allocation5 + $0x2b8] sm:$0xff]
    %v511 = vld [vmem:[#allocation5 + $0x2c0] sm:$0xff]
    %v512 = vld [vmem:[#allocation5 + $0x2c8] sm:$0xff]
    %v513 = vld [vmem:[#allocation5 + $0x2d0] sm:$0xff]
    %v514 = vld [vmem:[#allocation5 + $0x2d8] sm:$0xff]
    %v515 = vld [vmem:[#allocation5 + $0x2e0] sm:$0xff]
    %v516 = vld [vmem:[#allocation5 + $0x2e8] sm:$0xff]
    %v517 = vld [vmem:[#allocation5 + $0x2f0] sm:$0xff]
    %v518 = vld [vmem:[#allocation5 + $0x2f8] sm:$0xff]
    %v519 = vld [vmem:[#allocation5 + $0x300] sm:$0xff]
    %v520 = vld [vmem:[#allocation5 + $0x308] sm:$0xff]
    %v521 = vld [vmem:[#allocation5 + $0x310] sm:$0xff]
    %v522 = vld [vmem:[#allocation5 + $0x318] sm:$0xff]
    %v523 = vld [vmem:[#allocation5 + $0x320] sm:$0xff]
    %v524 = vld [vmem:[#allocation5 + $0x328] sm:$0xff]
    %v525 = vld [vmem:[#allocation5 + $0x330] sm:$0xff]
    %v526 = vld [vmem:[#allocation5 + $0x338] sm:$0xff]
    %v527 = vld [vmem:[#allocation5 + $0x340] sm:$0xff]
    %v528 = vld [vmem:[#allocation5 + $0x348] sm:$0xff]
    %v529 = vld [vmem:[#allocation5 + $0x350] sm:$0xff]
    %v530 = vld [vmem:[#allocation5 + $0x358] sm:$0xff]
    %v531 = vld [vmem:[#allocation5 + $0x360] sm:$0xff]
    %v532 = vld [vmem:[#allocation5 + $0x368] sm:$0xff]
    %v533 = vld [vmem:[#allocation5 + $0x370] sm:$0xff]
    %v534 = vld [vmem:[#allocation5 + $0x378] sm:$0xff]
    %v535 = vld [vmem:[#allocation5 + $0x380] sm:$0xff]
    %v536 = vld [vmem:[#allocation5 + $0x388] sm:$0xff]
    %v537 = vld [vmem:[#allocation5 + $0x390] sm:$0xff]
    %v538 = vld [vmem:[#allocation5 + $0x398] sm:$0xff]
    %v539 = vld [vmem:[#allocation5 + $0x3a0] sm:$0xff]
    %v540 = vld [vmem:[#allocation5 + $0x3a8] sm:$0xff]
    %v541 = vld [vmem:[#allocation5 + $0x3b0] sm:$0xff]
    %v542 = vld [vmem:[#allocation5 + $0x3b8] sm:$0xff]
    %v543 = vld [vmem:[#allocation5 + $0x3c0] sm:$0xff]
    %v544 = vld [vmem:[#allocation5 + $0x3c8] sm:$0xff]
    %v545 = vld [vmem:[#allocation5 + $0x3d0] sm:$0xff]
    %v546 = vld [vmem:[#allocation5 + $0x3d8] sm:$0xff]
    %v547 = vld [vmem:[#allocation5 + $0x3e0] sm:$0xff]
    %v548 = vld [vmem:[#allocation5 + $0x3e8] sm:$0xff]
    %v549 = vld [vmem:[#allocation5 + $0x3f0] sm:$0xff]
    %v550 = vld [vmem:[#allocation5 + $0x3f8] sm:$0xff]
    %v551 = vld [vmem:[#allocation7] sm:$0x3]
    %v553 = vperm.slane %v551, 0
    %v554 = vperm.slane %v551, 1
    %vm589 = vcmask 1041409
    %v590 = vsel %vm589, %v395, %v391
    %vm591 = vcmask 1042434
    %v592 = vsel %vm591, %v399, %v590
    %vm593 = vcmask 1043459
    %v594 = vsel %vm593, %v403, %v592
    %vm595 = vcmask 1044484
    %v596 = vsel %vm595, %v407, %v594
    %vm597 = vcmask 1045509
    %v598 = vsel %vm597, %v411, %v596
    %vm599 = vcmask 1046534
    %v600 = vsel %vm599, %v415, %v598
    %vm601 = vcmask 1047559
    %v602 = vsel %vm601, %v419, %v600
    %v603 = vsel %vm589, %v396, %v392
    %v604 = vsel %vm591, %v400, %v603
    %v605 = vsel %vm593, %v404, %v604
    %v606 = vsel %vm595, %v408, %v605
    %v607 = vsel %vm597, %v412, %v606
    %v608 = vsel %vm599, %v416, %v607
    %v609 = vsel %vm601, %v420, %v608
    %v610 = vsel %vm589, %v397, %v393
    %v611 = vsel %vm591, %v401, %v610
    %v612 = vsel %vm593, %v405, %v611
    %v613 = vsel %vm595, %v409, %v612
    %v614 = vsel %vm597, %v413, %v613
    %v615 = vsel %vm599, %v417, %v614
    %v616 = vsel %vm601, %v421, %v615
    %v617 = vsel %vm589, %v398, %v394
    %v618 = vsel %vm591, %v402, %v617
    %v619 = vsel %vm593, %v406, %v618
    %v620 = vsel %vm595, %v410, %v619
    %v621 = vsel %vm597, %v414, %v620
    %v622 = vsel %vm599, %v418, %v621
    %v623 = vsel %vm601, %v422, %v622
    %628 = vmatpush.msra.mxu0 %v453
    %629 = vmatpush.msra.mxu0 %v451
    %630 = vmatpush.msra.mxu0 %v449
    %631 = vmatpush.msra.mxu0 %v447
    %632 = vmatpush.msra.mxu0 %v445
    %633 = vmatpush.msra.mxu0 %v443
    %634 = vmatpush.msra.mxu0 %v441
    %635 = vmatpush.msra.mxu0 %v439
    %636 = vmatpush.msra.mxu0 %v437
    %637 = vmatpush.msra.mxu0 %v435
    %638 = vmatpush.msra.mxu0 %v433
    %639 = vmatpush.msra.mxu0 %v431
    %640 = vmatpush.msra.mxu0 %v429
    %641 = vmatpush.msra.mxu0 %v427
    %642 = vmatpush.msra.mxu0 %v425
    %643 = vmatpush.msra.mxu0 %v423
    %644 = vmatmul.f32.gmra.mxu0 %v602
    %v645 = vpop.f32.mrf.mxu0
    %v646 = vadd.f32 %v553, %v645
    %647 = vdwg.mxu0
    %648 = vmatpush.msra.mxu0 %v485
    %649 = vmatpush.msra.mxu0 %v483
    %650 = vmatpush.msra.mxu0 %v481
    %651 = vmatpush.msra.mxu0 %v479
    %652 = vmatpush.msra.mxu0 %v477
    %653 = vmatpush.msra.mxu0 %v475
    %654 = vmatpush.msra.mxu0 %v473
    %655 = vmatpush.msra.mxu0 %v471
    %656 = vmatpush.msra.mxu0 %v469
    %657 = vmatpush.msra.mxu0 %v467
    %658 = vmatpush.msra.mxu0 %v465
    %659 = vmatpush.msra.mxu0 %v463
    %660 = vmatpush.msra.mxu0 %v461
    %661 = vmatpush.msra.mxu0 %v459
    %662 = vmatpush.msra.mxu0 %v457
    %663 = vmatpush.msra.mxu0 %v455
    %664 = vmatmul.f32.gmra.mxu0 %v609
    %v665 = vpop.f32.mrf.mxu0
    %v666 = vadd.f32 %v646, %v665
    %667 = vdwg.mxu0
    %668 = vmatpush.msra.mxu0 %v517
    %669 = vmatpush.msra.mxu0 %v515
    %670 = vmatpush.msra.mxu0 %v513
    %671 = vmatpush.msra.mxu0 %v511
    %672 = vmatpush.msra.mxu0 %v509
    %673 = vmatpush.msra.mxu0 %v507
    %674 = vmatpush.msra.mxu0 %v505
    %675 = vmatpush.msra.mxu0 %v503
    %676 = vmatpush.msra.mxu0 %v501
    %677 = vmatpush.msra.mxu0 %v499
    %678 = vmatpush.msra.mxu0 %v497
    %679 = vmatpush.msra.mxu0 %v495
    %680 = vmatpush.msra.mxu0 %v493
    %681 = vmatpush.msra.mxu0 %v491
    %682 = vmatpush.msra.mxu0 %v489
    %683 = vmatpush.msra.mxu0 %v487
    %684 = vmatmul.f32.gmra.mxu0 %v616
    %v685 = vpop.f32.mrf.mxu0
    %v686 = vadd.f32 %v666, %v685
    %687 = vdwg.mxu0
    %688 = vmatpush.msra.mxu0 %v549
    %689 = vmatpush.msra.mxu0 %v547
    %690 = vmatpush.msra.mxu0 %v545
    %691 = vmatpush.msra.mxu0 %v543
    %692 = vmatpush.msra.mxu0 %v541
    %693 = vmatpush.msra.mxu0 %v539
    %694 = vmatpush.msra.mxu0 %v537
    %695 = vmatpush.msra.mxu0 %v535
    %696 = vmatpush.msra.mxu0 %v533
    %697 = vmatpush.msra.mxu0 %v531
    %698 = vmatpush.msra.mxu0 %v529
    %699 = vmatpush.msra.mxu0 %v527
    %700 = vmatpush.msra.mxu0 %v525
    %701 = vmatpush.msra.mxu0 %v523
    %702 = vmatpush.msra.mxu0 %v521
    %703 = vmatpush.msra.mxu0 %v519
    %704 = vmatmul.f32.gmra.mxu0 %v623
    %v705 = vpop.f32.mrf.mxu0
    %v706 = vadd.f32 %v686, %v705
    %707 = vdwg.mxu0
    %708 = vmatpush.msra.mxu0 %v454
    %709 = vmatpush.msra.mxu0 %v452
    %710 = vmatpush.msra.mxu0 %v450
    %711 = vmatpush.msra.mxu0 %v448
    %712 = vmatpush.msra.mxu0 %v446
    %713 = vmatpush.msra.mxu0 %v444
    %714 = vmatpush.msra.mxu0 %v442
    %715 = vmatpush.msra.mxu0 %v440
    %716 = vmatpush.msra.mxu0 %v438
    %717 = vmatpush.msra.mxu0 %v436
    %718 = vmatpush.msra.mxu0 %v434
    %719 = vmatpush.msra.mxu0 %v432
    %720 = vmatpush.msra.mxu0 %v430
    %721 = vmatpush.msra.mxu0 %v428
    %722 = vmatpush.msra.mxu0 %v426
    %723 = vmatpush.msra.mxu0 %v424
    %724 = vmatmul.f32.gmra.mxu0 %v602
    %v725 = vpop.f32.mrf.mxu0
    %v726 = vadd.f32 %v554, %v725
    %727 = vdwg.mxu0
    %728 = vmatpush.msra.mxu0 %v486
    %729 = vmatpush.msra.mxu0 %v484
    %730 = vmatpush.msra.mxu0 %v482
    %731 = vmatpush.msra.mxu0 %v480
    %732 = vmatpush.msra.mxu0 %v478
    %733 = vmatpush.msra.mxu0 %v476
    %734 = vmatpush.msra.mxu0 %v474
    %735 = vmatpush.msra.mxu0 %v472
    %736 = vmatpush.msra.mxu0 %v470
    %737 = vmatpush.msra.mxu0 %v468
    %738 = vmatpush.msra.mxu0 %v466
    %739 = vmatpush.msra.mxu0 %v464
    %740 = vmatpush.msra.mxu0 %v462
    %741 = vmatpush.msra.mxu0 %v460
    %742 = vmatpush.msra.mxu0 %v458
    %743 = vmatpush.msra.mxu0 %v456
    %744 = vmatmul.f32.gmra.mxu0 %v609
    %v745 = vpop.f32.mrf.mxu0
    %v746 = vadd.f32 %v726, %v745
    %747 = vdwg.mxu0
    %748 = vmatpush.msra.mxu0 %v518
    %749 = vmatpush.msra.mxu0 %v516
    %750 = vmatpush.msra.mxu0 %v514
    %751 = vmatpush.msra.mxu0 %v512
    %752 = vmatpush.msra.mxu0 %v510
    %753 = vmatpush.msra.mxu0 %v508
    %754 = vmatpush.msra.mxu0 %v506
    %755 = vmatpush.msra.mxu0 %v504
    %756 = vmatpush.msra.mxu0 %v502
    %757 = vmatpush.msra.mxu0 %v500
    %758 = vmatpush.msra.mxu0 %v498
    %759 = vmatpush.msra.mxu0 %v496
    %760 = vmatpush.msra.mxu0 %v494
    %761 = vmatpush.msra.mxu0 %v492
    %762 = vmatpush.msra.mxu0 %v490
    %763 = vmatpush.msra.mxu0 %v488
    %764 = vmatmul.f32.gmra.mxu0 %v616
    %v765 = vpop.f32.mrf.mxu0
    %v766 = vadd.f32 %v746, %v765
    %767 = vdwg.mxu0
    %768 = vmatpush.msra.mxu0 %v550
    %769 = vmatpush.msra.mxu0 %v548
    %770 = vmatpush.msra.mxu0 %v546
    %771 = vmatpush.msra.mxu0 %v544
    %772 = vmatpush.msra.mxu0 %v542
    %773 = vmatpush.msra.mxu0 %v540
    %774 = vmatpush.msra.mxu0 %v538
    %775 = vmatpush.msra.mxu0 %v536
    %776 = vmatpush.msra.mxu0 %v534
    %777 = vmatpush.msra.mxu0 %v532
    %778 = vmatpush.msra.mxu0 %v530
    %779 = vmatpush.msra.mxu0 %v528
    %780 = vmatpush.msra.mxu0 %v526
    %781 = vmatpush.msra.mxu0 %v524
    %782 = vmatpush.msra.mxu0 %v522
    %783 = vmatpush.msra.mxu0 %v520
    %784 = vmatmul.f32.gmra.mxu0 %v623
    %v785 = vpop.f32.mrf.mxu0
    %v786 = vadd.f32 %v766, %v785
    %787 = vdwg.mxu0
    %v788 = vmax.f32 %v706, 0.0
    %v789 = vmax.f32 %v786, 0.0
    %v790 = vld [vmem:[#allocation8] sm:$0xff]
    %v791 = vld [vmem:[#allocation8 + $0x8] sm:$0xff]
    %v792 = vld [vmem:[#allocation8 + $0x10] sm:$0xff]
    %v793 = vld [vmem:[#allocation8 + $0x18] sm:$0xff]
    %v794 = vld [vmem:[#allocation8 + $0x20] sm:$0xff]
    %v795 = vld [vmem:[#allocation8 + $0x28] sm:$0xff]
    %v796 = vld [vmem:[#allocation8 + $0x30] sm:$0xff]
    %v797 = vld [vmem:[#allocation8 + $0x38] sm:$0xff]
    %v798 = vld [vmem:[#allocation8 + $0x40] sm:$0xff]
    %v799 = vld [vmem:[#allocation8 + $0x48] sm:$0xff]
    %v800 = vld [vmem:[#allocation8 + $0x50] sm:$0xff]
    %v801 = vld [vmem:[#allocation8 + $0x58] sm:$0xff]
    %v802 = vld [vmem:[#allocation8 + $0x60] sm:$0xff]
    %v803 = vld [vmem:[#allocation8 + $0x68] sm:$0xff]
    %v804 = vld [vmem:[#allocation8 + $0x70] sm:$0xff]
    %v805 = vld [vmem:[#allocation8 + $0x78] sm:$0xff]
    %v806 = vld [vmem:[#allocation8 + $0x80] sm:$0xff]
    %v807 = vld [vmem:[#allocation8 + $0x88] sm:$0xff]
    %v808 = vld [vmem:[#allocation8 + $0x90] sm:$0xff]
    %v809 = vld [vmem:[#allocation8 + $0x98] sm:$0xff]
    %v810 = vld [vmem:[#allocation8 + $0xa0] sm:$0xff]
    %v811 = vld [vmem:[#allocation8 + $0xa8] sm:$0xff]
    %v812 = vld [vmem:[#allocation8 + $0xb0] sm:$0xff]
    %v813 = vld [vmem:[#allocation8 + $0xb8] sm:$0xff]
    %v814 = vld [vmem:[#allocation8 + $0xc0] sm:$0xff]
    %v815 = vld [vmem:[#allocation8 + $0xc8] sm:$0xff]
    %v816 = vld [vmem:[#allocation8 + $0xd0] sm:$0xff]
    %v817 = vld [vmem:[#allocation8 + $0xd8] sm:$0xff]
    %v818 = vld [vmem:[#allocation8 + $0xe0] sm:$0xff]
    %v819 = vld [vmem:[#allocation8 + $0xe8] sm:$0xff]
    %v820 = vld [vmem:[#allocation8 + $0xf0] sm:$0xff]
    %v821 = vld [vmem:[#allocation8 + $0xf8] sm:$0xff]
    %v822 = vld [vmem:[#allocation8 + $0x100] sm:$0xff]
    %v823 = vld [vmem:[#allocation8 + $0x108] sm:$0xff]
    %v824 = vld [vmem:[#allocation8 + $0x110] sm:$0xff]
    %v825 = vld [vmem:[#allocation8 + $0x118] sm:$0xff]
    %v826 = vld [vmem:[#allocation8 + $0x120] sm:$0xff]
    %v827 = vld [vmem:[#allocation8 + $0x128] sm:$0xff]
    %v828 = vld [vmem:[#allocation8 + $0x130] sm:$0xff]
    %v829 = vld [vmem:[#allocation8 + $0x138] sm:$0xff]
    %v830 = vld [vmem:[#allocation8 + $0x140] sm:$0xff]
    %v831 = vld [vmem:[#allocation8 + $0x148] sm:$0xff]
    %v832 = vld [vmem:[#allocation8 + $0x150] sm:$0xff]
    %v833 = vld [vmem:[#allocation8 + $0x158] sm:$0xff]
    %v834 = vld [vmem:[#allocation8 + $0x160] sm:$0xff]
    %v835 = vld [vmem:[#allocation8 + $0x168] sm:$0xff]
    %v836 = vld [vmem:[#allocation8 + $0x170] sm:$0xff]
    %v837 = vld [vmem:[#allocation8 + $0x178] sm:$0xff]
    %v838 = vld [vmem:[#allocation8 + $0x180] sm:$0xff]
    %v839 = vld [vmem:[#allocation8 + $0x188] sm:$0xff]
    %v840 = vld [vmem:[#allocation8 + $0x190] sm:$0xff]
    %v841 = vld [vmem:[#allocation8 + $0x198] sm:$0xff]
    %v842 = vld [vmem:[#allocation8 + $0x1a0] sm:$0xff]
    %v843 = vld [vmem:[#allocation8 + $0x1a8] sm:$0xff]
    %v844 = vld [vmem:[#allocation8 + $0x1b0] sm:$0xff]
    %v845 = vld [vmem:[#allocation8 + $0x1b8] sm:$0xff]
    %v846 = vld [vmem:[#allocation8 + $0x1c0] sm:$0xff]
    %v847 = vld [vmem:[#allocation8 + $0x1c8] sm:$0xff]
    %v848 = vld [vmem:[#allocation8 + $0x1d0] sm:$0xff]
    %v849 = vld [vmem:[#allocation8 + $0x1d8] sm:$0xff]
    %v850 = vld [vmem:[#allocation8 + $0x1e0] sm:$0xff]
    %v851 = vld [vmem:[#allocation8 + $0x1e8] sm:$0xff]
    %v852 = vld [vmem:[#allocation8 + $0x1f0] sm:$0xff]
    %v853 = vld [vmem:[#allocation8 + $0x1f8] sm:$0xff]
    %v854 = vld [vmem:[%s4] sm:$0x3]
    %v856 = vperm.slane %v854, 0
    %v857 = vperm.slane %v854, 1
    %860 = vmatpush.msra.mxu0 %v820
    %861 = vmatpush.msra.mxu0 %v818
    %862 = vmatpush.msra.mxu0 %v816
    %863 = vmatpush.msra.mxu0 %v814
    %864 = vmatpush.msra.mxu0 %v812
    %865 = vmatpush.msra.mxu0 %v810
    %866 = vmatpush.msra.mxu0 %v808
    %867 = vmatpush.msra.mxu0 %v806
    %868 = vmatpush.msra.mxu0 %v804
    %869 = vmatpush.msra.mxu0 %v802
    %870 = vmatpush.msra.mxu0 %v800
    %871 = vmatpush.msra.mxu0 %v798
    %872 = vmatpush.msra.mxu0 %v796
    %873 = vmatpush.msra.mxu0 %v794
    %874 = vmatpush.msra.mxu0 %v792
    %875 = vmatpush.msra.mxu0 %v790
    %876 = vmatmul.f32.gmra.mxu0 %v788
    %v877 = vpop.f32.mrf.mxu0
    %v878 = vadd.f32 %v856, %v877
    %879 = vdwg.mxu0
    %880 = vmatpush.msra.mxu0 %v852
    %881 = vmatpush.msra.mxu0 %v850
    %882 = vmatpush.msra.mxu0 %v848
    %883 = vmatpush.msra.mxu0 %v846
    %884 = vmatpush.msra.mxu0 %v844
    %885 = vmatpush.msra.mxu0 %v842
    %886 = vmatpush.msra.mxu0 %v840
    %887 = vmatpush.msra.mxu0 %v838
    %888 = vmatpush.msra.mxu0 %v836
    %889 = vmatpush.msra.mxu0 %v834
    %890 = vmatpush.msra.mxu0 %v832
    %891 = vmatpush.msra.mxu0 %v830
    %892 = vmatpush.msra.mxu0 %v828
    %893 = vmatpush.msra.mxu0 %v826
    %894 = vmatpush.msra.mxu0 %v824
    %895 = vmatpush.msra.mxu0 %v822
    %896 = vmatmul.f32.gmra.mxu0 %v789
    %v897 = vpop.f32.mrf.mxu0
    %v898 = vadd.f32 %v878, %v897
    %899 = vdwg.mxu0
    %900 = vmatpush.msra.mxu0 %v821
    %901 = vmatpush.msra.mxu0 %v819
    %902 = vmatpush.msra.mxu0 %v817
    %903 = vmatpush.msra.mxu0 %v815
    %904 = vmatpush.msra.mxu0 %v813
    %905 = vmatpush.msra.mxu0 %v811
    %906 = vmatpush.msra.mxu0 %v809
    %907 = vmatpush.msra.mxu0 %v807
    %908 = vmatpush.msra.mxu0 %v805
    %909 = vmatpush.msra.mxu0 %v803
    %910 = vmatpush.msra.mxu0 %v801
    %911 = vmatpush.msra.mxu0 %v799
    %912 = vmatpush.msra.mxu0 %v797
    %913 = vmatpush.msra.mxu0 %v795
    %914 = vmatpush.msra.mxu0 %v793
    %915 = vmatpush.msra.mxu0 %v791
    %916 = vmatmul.f32.gmra.mxu0 %v788
    %v917 = vpop.f32.mrf.mxu0
    %v918 = vadd.f32 %v857, %v917
    %919 = vdwg.mxu0
    %920 = vmatpush.msra.mxu0 %v853
    %921 = vmatpush.msra.mxu0 %v851
    %922 = vmatpush.msra.mxu0 %v849
    %923 = vmatpush.msra.mxu0 %v847
    %924 = vmatpush.msra.mxu0 %v845
    %925 = vmatpush.msra.mxu0 %v843
    %926 = vmatpush.msra.mxu0 %v841
    %927 = vmatpush.msra.mxu0 %v839
    %928 = vmatpush.msra.mxu0 %v837
    %929 = vmatpush.msra.mxu0 %v835
    %930 = vmatpush.msra.mxu0 %v833
    %931 = vmatpush.msra.mxu0 %v831
    %932 = vmatpush.msra.mxu0 %v829
    %933 = vmatpush.msra.mxu0 %v827
    %934 = vmatpush.msra.mxu0 %v825
    %935 = vmatpush.msra.mxu0 %v823
    %936 = vmatmul.f32.gmra.mxu0 %v789
    %v937 = vpop.f32.mrf.mxu0
    %v938 = vadd.f32 %v918, %v937
    %939 = vdwg.mxu0
    %v940 = vmax.f32 %v898, 0.0
    %v941 = vmax.f32 %v938, 0.0
    %v942 = vld [vmem:[#allocation10] sm:$0xff]
    %v943 = vld [vmem:[#allocation10 + $0x8] sm:$0xff]
    %v944 = vld [vmem:[#allocation10 + $0x10] sm:$0xff]
    %v945 = vld [vmem:[#allocation10 + $0x18] sm:$0xff]
    %v946 = vld [vmem:[#allocation10 + $0x20] sm:$0xff]
    %v947 = vld [vmem:[#allocation10 + $0x28] sm:$0xff]
    %v948 = vld [vmem:[#allocation10 + $0x30] sm:$0xff]
    %v949 = vld [vmem:[#allocation10 + $0x38] sm:$0xff]
    %v950 = vld [vmem:[#allocation10 + $0x40] sm:$0xff]
    %v951 = vld [vmem:[#allocation10 + $0x48] sm:$0xff]
    %v952 = vld [vmem:[#allocation10 + $0x50] sm:$0xff]
    %v953 = vld [vmem:[#allocation10 + $0x58] sm:$0xff]
    %v954 = vld [vmem:[#allocation10 + $0x60] sm:$0xff]
    %v955 = vld [vmem:[#allocation10 + $0x68] sm:$0xff]
    %v956 = vld [vmem:[#allocation10 + $0x70] sm:$0xff]
    %v957 = vld [vmem:[#allocation10 + $0x78] sm:$0xff]
    %v958 = vld [vmem:[#allocation10 + $0x80] sm:$0xff]
    %v959 = vld [vmem:[#allocation10 + $0x88] sm:$0xff]
    %v960 = vld [vmem:[#allocation10 + $0x90] sm:$0xff]
    %v961 = vld [vmem:[#allocation10 + $0x98] sm:$0xff]
    %v962 = vld [vmem:[#allocation10 + $0xa0] sm:$0xff]
    %v963 = vld [vmem:[#allocation10 + $0xa8] sm:$0xff]
    %v964 = vld [vmem:[#allocation10 + $0xb0] sm:$0xff]
    %v965 = vld [vmem:[#allocation10 + $0xb8] sm:$0xff]
    %v966 = vld [vmem:[#allocation10 + $0xc0] sm:$0xff]
    %v967 = vld [vmem:[#allocation10 + $0xc8] sm:$0xff]
    %v968 = vld [vmem:[#allocation10 + $0xd0] sm:$0xff]
    %v969 = vld [vmem:[#allocation10 + $0xd8] sm:$0xff]
    %v970 = vld [vmem:[#allocation10 + $0xe0] sm:$0xff]
    %v971 = vld [vmem:[#allocation10 + $0xe8] sm:$0xff]
    %v972 = vld [vmem:[#allocation10 + $0xf0] sm:$0xff]
    %v973 = vld [vmem:[#allocation10 + $0xf8] sm:$0xff]
    %v974 = vld [vmem:[%s6] sm:$0x1]
    %v976 = vperm.slane %v974, 0
    %978 = vmatpush.msra.mxu0 %v957
    %979 = vmatpush.msra.mxu0 %v956
    %980 = vmatpush.msra.mxu0 %v955
    %981 = vmatpush.msra.mxu0 %v954
    %982 = vmatpush.msra.mxu0 %v953
    %983 = vmatpush.msra.mxu0 %v952
    %984 = vmatpush.msra.mxu0 %v951
    %985 = vmatpush.msra.mxu0 %v950
    %986 = vmatpush.msra.mxu0 %v949
    %987 = vmatpush.msra.mxu0 %v948
    %988 = vmatpush.msra.mxu0 %v947
    %989 = vmatpush.msra.mxu0 %v946
    %990 = vmatpush.msra.mxu0 %v945
    %991 = vmatpush.msra.mxu0 %v944
    %992 = vmatpush.msra.mxu0 %v943
    %993 = vmatpush.msra.mxu0 %v942
    %994 = vmatmul.f32.gmra.mxu0 %v940
    %v995 = vpop.f32.mrf.mxu0
    %v996 = vadd.f32 %v976, %v995
    %997 = vdwg.mxu0
    %998 = vmatpush.msra.mxu0 %v973
    %999 = vmatpush.msra.mxu0 %v972
    %1000 = vmatpush.msra.mxu0 %v971
    %1001 = vmatpush.msra.mxu0 %v970
    %1002 = vmatpush.msra.mxu0 %v969
    %1003 = vmatpush.msra.mxu0 %v968
    %1004 = vmatpush.msra.mxu0 %v967
    %1005 = vmatpush.msra.mxu0 %v966
    %1006 = vmatpush.msra.mxu0 %v965
    %1007 = vmatpush.msra.mxu0 %v964
    %1008 = vmatpush.msra.mxu0 %v963
    %1009 = vmatpush.msra.mxu0 %v962
    %1010 = vmatpush.msra.mxu0 %v961
    %1011 = vmatpush.msra.mxu0 %v960
    %1012 = vmatpush.msra.mxu0 %v959
    %1013 = vmatpush.msra.mxu0 %v958
    %1014 = vmatmul.f32.gmra.mxu0 %v941
    %v1015 = vpop.f32.mrf.mxu0
    %v1016 = vadd.f32 %v996, %v1015
    %1017 = vdwg.mxu0
    %1018 = vst [vmem:[#allocation11] sm:$0xff] %v1016
    // Predicated region
    $region50: #{tpu_custom_call.1} parent=1 // pred_check
      _
    $region51: #{tpu_custom_call.1} parent=1 // pred_check_branch
      %1020 = sbr.rel (0) target = $region53
    $region52: #{tpu_custom_call.1} parent=1 // pred_region
      %1022 = vsyncadd [#allocation4], 0
      %s1024 = sshll.u32 [#allocation11], 4
      %s1025 = int_to_ptr.vmem [resolvable:$true] %s1024
      %s1026 = sshll.u32 %s7, 4
      %s1027 = int_to_ptr.hbm [resolvable:$true] %s1026
      %1029 = dma.vmem_to_hbm [thread:$0]  %s1025, 128, %s1027, [#allocation4]
    $region53: #{tpu_custom_call.1} parent=1 // pred_fallthru
      _
    // Predicated region
    $region54: #{tpu_custom_call.1} parent=1 // pred_check
      _
    $region55: #{tpu_custom_call.1} parent=1 // pred_check_branch
      %1031 = sbr.rel (0) target = $region57
    $region56: #{tpu_custom_call.1} parent=1 // pred_region
      %1033 = dma.done [#allocation4], 128
    $region57: #{tpu_custom_call.1} parent=1 // pred_fallthru
      _
    %1034 = vsyncpa [#allocation3], 1
    %1035 = vsyncpa [#allocation6], 1
    %1036 = vsyncpa [#allocation9], 1
    %1037 = vsyncpa [#allocation4], 1

</llo_original>
